<compile_context>
chip_gen: v7x
topology: tpu7x:2x2x1
jax: 0.10.0
libtpu: 0.0.40
codegen_flags: <defaults>
</compile_context>

<pallas_src>
import functools

import jax
import jax.numpy as jnp
from jax.experimental import pallas as pl
from jax.experimental.pallas import tpu as pltpu


_LANES = 1024                   # lane-dense slab width (multiple of 128)
_TARGET_BLOCK_BYTES = 4 << 20   # ~4 MiB per input tile
_VMEM_LIMIT_BYTES = 32 << 20    # explicit scoped-VMEM limit (<= v7x 64 MiB physical)


def _swish_kernel(sp_ref, x_ref, o_ref, *, compute_dtype):
    # sp = softplus(beta), precomputed in the wrapper, one SMEM scalar.
    sp = sp_ref[0].astype(compute_dtype)
    xv = x_ref[...].astype(compute_dtype)
    z = xv * sp
    # sigmoid(z) = 1 / (1 + exp(-z)): one EUP exp + one approximate EUP
    # reciprocal -> no precise divide on the VALU slots, kernel stays HBM-bound.
    p = pl.reciprocal(1.0 + jnp.exp(-z), approx=True)
    y = xv * p * (1.0 / 1.1)
    o_ref[...] = y.astype(o_ref.dtype)


def _block_rows(rows, lanes, itemsize):
    """Byte-targeted block rows.

    - multiple of 8 (or the full extent) so the (8, 128) tiling constraint holds
    - capped at ceil(rows/2) (rounded to a multiple of 8) so the 1-D grid has at
      least 2 steps whenever rows > 8 -> the "parallel" axis can actually be
      sharded across v7x's two TensorCores.
    """
    if rows <= 8:
        return rows
    target = max(8, (_TARGET_BLOCK_BYTES // (lanes * itemsize)) // 8 * 8)
    half = -(-rows // 2)          # ceil(rows / 2)
    half8 = -(-half // 8) * 8     # rounded up to a multiple of 8 (< rows for rows > 8)
    return min(target, half8)


def _swish_pallas_2d(x2d, sp):
    rows, lanes = x2d.shape
    itemsize = jnp.dtype(x2d.dtype).itemsize
    block_rows = _block_rows(rows, lanes, itemsize)
    grid = (pl.cdiv(rows, block_rows),)

    # bf16 compute is native on v6e/v7x (halves vreg pressure); f32 otherwise.
    compute_dtype = jnp.bfloat16 if x2d.dtype == jnp.bfloat16 else jnp.float32
    kernel = functools.partial(_swish_kernel, compute_dtype=compute_dtype)

    n = rows * lanes
    return pl.pallas_call(
        kernel,
        out_shape=jax.ShapeDtypeStruct((rows, lanes), x2d.dtype),
        grid=grid,
        in_specs=[
            pl.BlockSpec(memory_space=pltpu.SMEM),                # softplus(beta) scalar
            pl.BlockSpec((block_rows, lanes), lambda i: (i, 0)),  # x tile
        ],
        out_specs=pl.BlockSpec((block_rows, lanes), lambda i: (i, 0)),
        compiler_params=pltpu.CompilerParams(
            dimension_semantics=("parallel",),
            vmem_limit_bytes=_VMEM_LIMIT_BYTES,
        ),
        cost_estimate=pl.CostEstimate(
            flops=4 * n, transcendentals=2 * n, bytes_accessed=2 * n * itemsize),
    )(sp, x2d)


def swish_pallas(x, beta):
    """x: any-shape float array (e.g. NCHW). beta: shape (1,) parameter."""
    orig_shape = x.shape
    n = x.size
    if n == 0:
        return x

    # Hoist softplus(beta) out of the kernel; numerically stable formulation.
    sp = jax.nn.softplus(beta.astype(jnp.float32)).reshape((1,))

    x_flat = jnp.ravel(x)
    lanes = _LANES

    if n % lanes != 0:
        # No pad copy: main kernel on the 1024-aligned prefix, tiny XLA
        # elementwise op on the (< 1024-element) tail.
        n_main = (n // lanes) * lanes
        tail = x_flat[n_main:].astype(jnp.float32)
        tail_out = ((tail * jax.nn.sigmoid(tail * sp[0])) / 1.1).astype(x.dtype)
        if n_main == 0:
            return tail_out.reshape(orig_shape)
        main2d = _swish_pallas_2d(x_flat[:n_main].reshape(n_main // lanes, lanes), sp)
        out_flat = jnp.concatenate([main2d.reshape(-1), tail_out])
        return out_flat.reshape(orig_shape)

    rows = n // lanes
    out2d = _swish_pallas_2d(x_flat.reshape(rows, lanes), sp)
    return out2d.reshape(orig_shape)


def swish_reference(x, beta):
    sp = jax.nn.softplus(beta[0])
    return (x * jax.nn.sigmoid(x * sp)) / 1.1


if __name__ == "__main__":
    key = jax.random.PRNGKey(0)
    # NCHW input consistent with a conv-net activation feature map.
    x = jax.random.normal(key, (2, 4, 16, 16), dtype=jnp.float32)

    # Deterministic parameter init, matching nn.Parameter(torch.tensor([0.5])).
    beta = jnp.array([0.5], dtype=jnp.float32)

    out = jax.block_until_ready(swish_pallas(x, beta))

    ref = swish_reference(x, beta)
    assert out.shape == x.shape and out.dtype == x.dtype
    # Tolerance accounts for the approximate EUP reciprocal used inside the
    # kernel's sigmoid (bounded, sub-1e-3 relative error on these magnitudes).
    assert jnp.allclose(out, ref, atol=5e-3, rtol=5e-3), float(jnp.max(jnp.abs(out - ref)))

    print("KERNEL_OK")
</pallas_src>

<mosaic_0001>
module attributes {stable_mosaic.version = 11 : i64} {
  func.func @_swish_kernel(%arg0: i32, %arg1: memref<1xf32, #tpu.memory_space<smem>>, %arg2: memref<2x1024xf32, #tpu.memory_space<vmem>>, %arg3: memref<2x1024xf32, #tpu.memory_space<vmem>>) attributes {dimension_semantics = [#tpu.dimension_semantics<parallel>], iteration_bounds = array<i64: 1>, scalar_prefetch = 0 : i64, scratch_operands = 0 : i64, tpu.core_type = #tpu.core_type<tc>, window_params = [{transform_indices = @transform_0, window_bounds = array<i64: 1>}, {transform_indices = @transform_1, window_bounds = array<i64: 2, 1024>}, {transform_indices = @transform_2, window_bounds = array<i64: 2, 1024>}]} {
    %c0 = arith.constant 0 : index
    %0 = memref.load %arg1[%c0] : memref<1xf32, #tpu.memory_space<smem>>
    %c0_0 = arith.constant 0 : index
    %c0_1 = arith.constant 0 : index
    %1 = vector.load %arg2[%c0_0, %c0_1] : memref<2x1024xf32, #tpu.memory_space<vmem>>, vector<2x1024xf32>
    %2 = vector.broadcast %0 : f32 to vector<2x1024xf32>
    %3 = arith.mulf %1, %2 : vector<2x1024xf32>
    %cst = arith.constant 0.000000e+00 : f32
    %4 = vector.broadcast %cst : f32 to vector<2x1024xf32>
    %5 = arith.subf %4, %3 : vector<2x1024xf32>
    %6 = math.exp %5 : vector<2x1024xf32>
    %cst_2 = arith.constant 1.000000e+00 : f32
    %7 = vector.broadcast %cst_2 : f32 to vector<2x1024xf32>
    %8 = arith.addf %7, %6 : vector<2x1024xf32>
    %9 = tpu.reciprocal %8 {approx = true} : vector<2x1024xf32> -> vector<2x1024xf32>
    %10 = arith.mulf %1, %9 : vector<2x1024xf32>
    %cst_3 = arith.constant 0.909090936 : f32
    %11 = vector.broadcast %cst_3 : f32 to vector<2x1024xf32>
    %12 = arith.mulf %10, %11 : vector<2x1024xf32>
    %c0_4 = arith.constant 0 : index
    %c0_5 = arith.constant 0 : index
    %13 = vector.load %arg3[%c0_4, %c0_5] : memref<2x1024xf32, #tpu.memory_space<vmem>>, vector<2x1024xf32>
    tpu.vector_store %arg3[%c0_4, %c0_5], %12 {strides = array<i32>} : memref<2x1024xf32, #tpu.memory_space<vmem>>, vector<2x1024xf32>,
    return
  }
  func.func @transform_0(%arg0: i32) -> i32 {
    %c0_i32 = arith.constant 0 : i32
    %c0_i32_0 = arith.constant 0 : i32
    return %c0_i32 : i32
  }
  func.func @transform_1(%arg0: i32) -> (i32, i32) {
    %c0_i32 = arith.constant 0 : i32
    %c0_i32_0 = arith.constant 0 : i32
    return %arg0, %c0_i32 : i32, i32
  }
  func.func @transform_2(%arg0: i32) -> (i32, i32) {
    %c0_i32 = arith.constant 0 : i32
    %c0_i32_0 = arith.constant 0 : i32
    return %arg0, %c0_i32 : i32, i32
  }
}

</mosaic_0001>

<llo_original>
// kernel: tpu_custom_call.1
$region0: #{tpu_custom_call.1}
  #allocation0 [shape = 'u32[]', space=smem, size = 0x4, offset = 0x4, fixed_abs, tag = 'smem constant byte address 0x4 - core index']
  #allocation1 [shape = 'u32[144,128]{1,0:T(1,128)}', space=vmem, size = 0x12000, scoped, tag = 'internal scratch']
  #allocation2 [shape = 'f32[1]{0:T(128)S(6)}', space=smem, size = 0x200, scoped, tag = 'scoped memory for tpu_custom_call.1']
  %s0 = inlined_call_operand.<no memory space> [shape: f32[1], index: 0, kind: input, shape index: {}]
  %s1 = inlined_call_operand.hbm [shape: f32[2,1024], index: 1, kind: input, shape index: {}]
  %s2 = inlined_call_operand.hbm [shape: f32[2,1024], index: 2, kind: output, shape index: {}]
  %s3 = sld [smem:[#allocation0]]
  $region22: #{tpu_custom_call.1} parent=0
    _
  %s5 = ssub.s32 1, %s3
  %s6 = scalar_select 0, %s5, %s3
  %7 = sst [smem:[#allocation2]] %s0
  $region1: #{tpu_custom_call.1} parent=0
    #allocation3 [shape = 'u8[8192]{0}', space=vmem, size = 0x2000, scoped, tag = 'input window, operand 1, single buffered']
    #allocation4 [shape = 's32[1]{0}', space=sflag, size = 0x4, scoped, tag = 'scoped memory for tpu_custom_call.1']
    #allocation5 [shape = 's32[1]{0}', space=sflag, size = 0x4, scoped, tag = 'scoped memory for tpu_custom_call.1']
    #allocation6 [shape = 'u8[8192]{0}', space=vmem, size = 0x2000, scoped, tag = 'output window, operand 0, single buffered']
    %8 = vsyncpa [#allocation4], 0
    %9 = vsyncpa [#allocation5], 0
    // Predicated region
    $region2: #{tpu_custom_call.1} parent=1 // pred_check
      _
    $region3: #{tpu_custom_call.1} parent=1 // pred_check_branch
      %11 = sbr.rel (0) target = $region5
    $region4: #{tpu_custom_call.1} parent=1 // pred_region
      _
    $region5: #{tpu_custom_call.1} parent=1 // pred_fallthru
      _
    // Predicated region
    $region6: #{tpu_custom_call.1} parent=1 // pred_check
      _
    $region7: #{tpu_custom_call.1} parent=1 // pred_check_branch
      %13 = sbr.rel (0) target = $region9
    $region8: #{tpu_custom_call.1} parent=1 // pred_region
      %s15 = ssub.s32 256, 256
      %16 = vsyncadd [#allocation4], %s15
      %s18 = sshll.u32 [#allocation3], 4
      %s19 = int_to_ptr.vmem [resolvable:$true] %s18
      %21 = dma.hbm_to_vmem [thread:$0]  %s1, 256, %s19, [#allocation4]
    $region9: #{tpu_custom_call.1} parent=1 // pred_fallthru
      _
    // Predicated region
    $region10: #{tpu_custom_call.1} parent=1 // pred_check
      _
    $region11: #{tpu_custom_call.1} parent=1 // pred_check_branch
      %23 = sbr.rel (0) target = $region13
    $region12: #{tpu_custom_call.1} parent=1 // pred_region
      %24 = dma.done [#allocation4], 256
    $region13: #{tpu_custom_call.1} parent=1 // pred_fallthru
      _
    %s25 = sld [smem:[#allocation2]]
    %v26 = vld [vmem:[#allocation3] sm:$0xff]
    %v27 = vld [vmem:[#allocation3 + $0x8] sm:$0xff]
    %v28 = vstv %s25
    %v29 = vmul.f32 %v26, %v28
    %v30 = vmul.f32 %v27, %v28
    %v31 = vsub.f32 0.0, %v29
    %v32 = vsub.f32 0.0, %v30
    %v33 = vmul.f32 %v31, 1.442695
    %v34 = vpow.pop %v33
    %v35 = vmul.f32 %v32, 1.442695
    %v36 = vpow.pop %v35
    %v37 = vadd.f32 %v34, 1.0
    %v38 = vadd.f32 %v36, 1.0
    %v39 = vrcp.pop %v37
    %v40 = vrcp.pop %v38
    %v41 = vmul.f32 %v26, %v39
    %v42 = vmul.f32 %v27, %v40
    %v43 = vmul.f32 %v41, 0.90909094
    %v44 = vmul.f32 %v42, 0.90909094
    %45 = vst [vmem:[#allocation6] sm:$0xff] %v43
    %46 = vst [vmem:[#allocation6 + $0x8] sm:$0xff] %v44
    // Predicated region
    $region14: #{tpu_custom_call.1} parent=1 // pred_check
      _
    $region15: #{tpu_custom_call.1} parent=1 // pred_check_branch
      %48 = sbr.rel (0) target = $region17
    $region16: #{tpu_custom_call.1} parent=1 // pred_region
      %s50 = ssub.s32 256, 256
      %51 = vsyncadd [#allocation5], %s50
      %s53 = sshll.u32 [#allocation6], 4
      %s54 = int_to_ptr.vmem [resolvable:$true] %s53
      %56 = dma.vmem_to_hbm [thread:$0]  %s54, 256, %s2, [#allocation5]
    $region17: #{tpu_custom_call.1} parent=1 // pred_fallthru
      _
    // Predicated region
    $region18: #{tpu_custom_call.1} parent=1 // pred_check
      _
    $region19: #{tpu_custom_call.1} parent=1 // pred_check_branch
      %58 = sbr.rel (0) target = $region21
    $region20: #{tpu_custom_call.1} parent=1 // pred_region
      %59 = dma.done [#allocation5], 256
    $region21: #{tpu_custom_call.1} parent=1 // pred_fallthru
      _
    %60 = vsyncpa [#allocation4], 1
    %61 = vsyncpa [#allocation5], 1

</llo_original>
